<compile_context>
chip_gen: v5e
topology: v5e:2x2
jax: 0.10.0
libtpu: 0.0.40
codegen_flags: <defaults>
</compile_context>

<pallas_src>
import functools
import math

import jax
import jax.numpy as jnp
from jax.experimental import pallas as pl
from jax.experimental.pallas import tpu as pltpu


def _cba_matmul_kernel(p_ref, w_ref, shift_ref, o_ref):
    """out = relu(patches @ w_folded + shift) for one lane-dense GEMM tile.

    p_ref:     (TILE_M, K)      bf16 im2col patches (K = KH*KW*Cin)
    w_ref:     (K, C_PAD)       bf16 conv weights with the BN scale folded in
    shift_ref: (1, C_PAD)       f32 folded BN shift
    o_ref:     (TILE_M, C_PAD)  f32 output tile (C_PAD % 128 == 0 -> unmasked stores)
    """
    acc = jnp.dot(p_ref[...], w_ref[...], preferred_element_type=jnp.float32)
    o_ref[...] = jnp.maximum(acc + shift_ref[...], 0.0).astype(o_ref.dtype)


def _round_up(x, m):
    return ((x + m - 1) // m) * m


@functools.partial(jax.jit, static_argnames=("stride", "padding", "tile_m"))
def cba_forward(x_nchw, weight_oihw, bn_gamma, bn_beta, bn_mean, bn_var,
                eps=1e-5, *, stride=1, padding=0, tile_m=256):
    """Conv2d(no bias) + BatchNorm2d(inference) + ReLU.  x_nchw: (N, Cin, H, W) -> (N, Cout, Ho, Wo)."""
    N, Cin, H, W = x_nchw.shape
    Cout, _, KH, KW = weight_oihw.shape

    if padding:
        x_nchw = jnp.pad(x_nchw, ((0, 0), (0, 0), (padding, padding), (padding, padding)))
        H += 2 * padding
        W += 2 * padding
    Ho = (H - KH) // stride + 1
    Wo = (W - KW) // stride + 1

    # ---- Fold BatchNorm (inference form) into the conv weights + a per-channel shift. ----
    scale = bn_gamma * jax.lax.rsqrt(bn_var + eps)                 # (Cout,)
    shift = bn_beta - bn_mean * scale                              # (Cout,)
    w_folded = weight_oihw * scale[:, None, None, None]            # (Cout, Cin, KH, KW)

    # ---- im2col: build a single (M, K) patch slab (packs the tiny Cin into lanes). ----
    x_nhwc = jnp.transpose(x_nchw, (0, 2, 3, 1))                   # (N, H, W, Cin)
    taps = []
    for kh in range(KH):
        for kw in range(KW):
            taps.append(x_nhwc[:, kh:kh + stride * Ho:stride, kw:kw + stride * Wo:stride, :])
    K = KH * KW * Cin
    M = N * Ho * Wo
    patches = jnp.concatenate(taps, axis=-1).reshape(M, K)         # (M, KH*KW*Cin)

    # Weight layout matching the tap order (kh, kw, cin) -> (K, Cout).
    w2d = jnp.transpose(w_folded, (2, 3, 1, 0)).reshape(K, Cout)

    # ---- Pad: lane-dense output channels, M tiled into >= 1 grid steps of tile_m rows. ----
    c_pad = _round_up(Cout, 128)
    tile_m = min(tile_m, _round_up(M, 8))
    n_tiles = pl.cdiv(M, tile_m)
    m_pad = tile_m * n_tiles

    patches = jnp.pad(patches, ((0, m_pad - M), (0, 0))).astype(jnp.bfloat16)
    w2d = jnp.pad(w2d, ((0, 0), (0, c_pad - Cout))).astype(jnp.bfloat16)
    shift2d = jnp.pad(shift.reshape(1, Cout), ((0, 0), (0, c_pad - Cout))).astype(jnp.float32)

    out = pl.pallas_call(
        _cba_matmul_kernel,
        out_shape=jax.ShapeDtypeStruct((m_pad, c_pad), jnp.float32),
        grid=(n_tiles,),
        in_specs=[
            pl.BlockSpec((tile_m, K), lambda i: (i, 0)),
            pl.BlockSpec((K, c_pad), lambda i: (0, 0)),
            pl.BlockSpec((1, c_pad), lambda i: (0, 0)),
        ],
        out_specs=pl.BlockSpec((tile_m, c_pad), lambda i: (i, 0)),
        compiler_params=pltpu.CompilerParams(
            dimension_semantics=("parallel",),
        ),
    )(patches, w2d, shift2d)

    # Strip padding, back to NCHW to match the PyTorch module.
    out = out[:M, :Cout].reshape(N, Ho, Wo, Cout)
    return jnp.transpose(out, (0, 3, 1, 2))


def init_params(key, in_channels, out_channels, kernel_size):
    """Deterministic parameter init matching CBAModule.__init__ shapes."""
    # Conv weight: xavier_uniform over (Cout, Cin, KH, KW), no conv bias.
    fan_in = in_channels * kernel_size * kernel_size
    fan_out = out_channels * kernel_size * kernel_size
    bound = math.sqrt(6.0 / (fan_in + fan_out))
    w = jax.random.uniform(
        key, (out_channels, in_channels, kernel_size, kernel_size),
        minval=-bound, maxval=bound, dtype=jnp.float32,
    )
    # BatchNorm2d default init.
    gamma = jnp.ones((out_channels,), jnp.float32)
    beta = jnp.zeros((out_channels,), jnp.float32)
    running_mean = jnp.zeros((out_channels,), jnp.float32)
    running_var = jnp.ones((out_channels,), jnp.float32)
    return w, gamma, beta, running_mean, running_var


if __name__ == "__main__":
    key = jax.random.PRNGKey(0)
    k_x, k_w = jax.random.split(key)

    N, Cin, H, W = 2, 4, 16, 16
    Cout, Ksz = 24, 3  # CBAModule defaults: out_channels=24, kernel_size=3, stride=1, padding=0

    x = jax.random.normal(k_x, (N, Cin, H, W), dtype=jnp.float32)
    w, gamma, beta, mean, var = init_params(k_w, Cin, Cout, Ksz)

    out = cba_forward(x, w, gamma, beta, mean, var)
    out = jax.block_until_ready(out)

    # Pure-JAX reference (same inference-mode BN fold, f32 conv).
    conv = jax.lax.conv_general_dilated(
        x, w, window_strides=(1, 1), padding="VALID",
        dimension_numbers=("NCHW", "OIHW", "NCHW"),
        precision=jax.lax.Precision.HIGHEST,
    )
    r_scale = gamma / jnp.sqrt(var + 1e-5)
    r_shift = beta - mean * r_scale
    ref = jnp.maximum(conv * r_scale[None, :, None, None] + r_shift[None, :, None, None], 0.0)

    assert out.shape == (N, Cout, H - Ksz + 1, W - Ksz + 1), out.shape
    assert bool(jnp.all(out >= 0.0)), "ReLU output must be non-negative"
    max_err = float(jnp.max(jnp.abs(out - ref)))
    assert bool(jnp.allclose(out, ref, atol=5e-2, rtol=5e-2)), f"max abs err {max_err}"
    print("KERNEL_OK")
</pallas_src>

<mosaic_0001>
module attributes {stable_mosaic.version = 11 : i64} {
  func.func @_cba_matmul_kernel(%arg0: i32, %arg1: memref<256x36xbf16, #tpu.memory_space<vmem>>, %arg2: memref<36x128xbf16, #tpu.memory_space<vmem>>, %arg3: memref<1x128xf32, #tpu.memory_space<vmem>>, %arg4: memref<256x128xf32, #tpu.memory_space<vmem>>) attributes {dimension_semantics = [#tpu.dimension_semantics<parallel>], iteration_bounds = array<i64: 2>, scalar_prefetch = 0 : i64, scratch_operands = 0 : i64, tpu.core_type = #tpu.core_type<tc>, window_params = [{transform_indices = @transform_0, window_bounds = array<i64: 256, 36>}, {pipeline_mode = #tpu.pipeline_mode<synchronous>, transform_indices = @transform_1, window_bounds = array<i64: 36, 128>}, {pipeline_mode = #tpu.pipeline_mode<synchronous>, transform_indices = @transform_2, window_bounds = array<i64: 1, 128>}, {transform_indices = @transform_3, window_bounds = array<i64: 256, 128>}]} {
    %c0 = arith.constant 0 : index
    %c0_0 = arith.constant 0 : index
    %0 = vector.load %arg1[%c0, %c0_0] : memref<256x36xbf16, #tpu.memory_space<vmem>>, vector<256x36xbf16>
    %c0_1 = arith.constant 0 : index
    %c0_2 = arith.constant 0 : index
    %1 = vector.load %arg2[%c0_1, %c0_2] : memref<36x128xbf16, #tpu.memory_space<vmem>>, vector<36x128xbf16>
    %cst = arith.constant dense<0.000000e+00> : vector<256x128xf32>
    %2 = tpu.matmul %0, %1, %cst {dimension_numbers = #tpu.dot_dimension_numbers<[1], [0], [0], [1], [0, 0, 1, 1], [], []>} : vector<256x36xbf16>, vector<36x128xbf16>, vector<256x128xf32> -> vector<256x128xf32>
    %c0_3 = arith.constant 0 : index
    %c0_4 = arith.constant 0 : index
    %3 = vector.load %arg3[%c0_3, %c0_4] : memref<1x128xf32, #tpu.memory_space<vmem>>, vector<1x128xf32>
    %4 = vector.broadcast %3 : vector<1x128xf32> to vector<256x128xf32>
    %5 = arith.addf %2, %4 : vector<256x128xf32>
    %cst_5 = arith.constant 0.000000e+00 : f32
    %6 = vector.broadcast %cst_5 : f32 to vector<256x128xf32>
    %7 = arith.maximumf %5, %6 : vector<256x128xf32>
    %c0_6 = arith.constant 0 : index
    %c0_7 = arith.constant 0 : index
    %8 = vector.load %arg4[%c0_6, %c0_7] : memref<256x128xf32, #tpu.memory_space<vmem>>, vector<256x128xf32>
    tpu.vector_store %arg4[%c0_6, %c0_7], %7 {strides = array<i32>} : memref<256x128xf32, #tpu.memory_space<vmem>>, vector<256x128xf32>,
    return
  }
  func.func @transform_0(%arg0: i32) -> (i32, i32) {
    %c0_i32 = arith.constant 0 : i32
    %c0_i32_0 = arith.constant 0 : i32
    return %arg0, %c0_i32 : i32, i32
  }
  func.func @transform_1(%arg0: i32) -> (i32, i32) {
    %c0_i32 = arith.constant 0 : i32
    %c0_i32_0 = arith.constant 0 : i32
    %c0_i32_1 = arith.constant 0 : i32
    return %c0_i32, %c0_i32_0 : i32, i32
  }
  func.func @transform_2(%arg0: i32) -> (i32, i32) {
    %c0_i32 = arith.constant 0 : i32
    %c0_i32_0 = arith.constant 0 : i32
    %c0_i32_1 = arith.constant 0 : i32
    return %c0_i32, %c0_i32_0 : i32, i32
  }
  func.func @transform_3(%arg0: i32) -> (i32, i32) {
    %c0_i32 = arith.constant 0 : i32
    %c0_i32_0 = arith.constant 0 : i32
    return %arg0, %c0_i32 : i32, i32
  }
}

</mosaic_0001>

<llo_original>
// kernel: cba_forward.1
$region0: #{cba_forward.1}
  #allocation0 [shape = 'u32[]', space=smem, size = 0x4, offset = 0x4, fixed_abs, tag = 'smem constant byte address 0x4 - core index']
  #allocation1 [shape = 'u32[72,128]{1,0:T(1,128)}', space=vmem, size = 0x9000, scoped, tag = 'internal scratch']
  %s0 = inlined_call_operand.vmem [shape: bf16[512,36], index: 0, kind: input, shape index: {}]
  %s1 = inlined_call_operand.vmem [shape: bf16[36,128], index: 1, kind: input, shape index: {}]
  %s2 = inlined_call_operand.vmem [shape: f32[1,128], index: 2, kind: input, shape index: {}]
  %s3 = inlined_call_operand.vmem [shape: f32[512,128], index: 3, kind: output, shape index: {}]
  %s4 = sld [smem:[#allocation0]]
  $region45: #{cba_forward.1} parent=0
    _
  %s6 = ssub.s32 1, %s4
  %s7 = scalar_select 0, %s6, %s4
  loop: start=0, step=1, limit=4
  $region2: #{cba_forward.1} parent=0 // loop_pre_header
    _
  $region3: #{cba_forward.1} parent=0 // loop_header
    %s9 = sphi 0, %s13
    %p10 = scmp.ge.s32.totalorder %s9, 4
    %s19 = sphi 0, %s21
    %s22 = sphi 0, %s19
    %s23 = sphi 0, %s22
    %s39 = sphi 0, %s23
    %s43 = sphi 0, %s43
    %s45 = sphi 0, %s43
    %s46 = sphi 0, %s45
    %s60 = sphi 0, %s46
    %s64 = sphi 0, %s64
    %s66 = sphi 0, %s64
    %s67 = sphi 0, %s66
    %s81 = sphi 0, %s67
    %s87 = sphi 0, %s89
    %s90 = sphi 0, %s87
    %s91 = sphi 0, %s90
    %s107 = sphi 0, %s91
  $region4: #{cba_forward.1} parent=0 // loop_header_branch
    %12 = sbr.rel (%p10) target = $region8
  $region5: #{cba_forward.1} parent=0 // loop_body
    %s14 = ssub.s32 %s9, 1
    %s15 = ssub.s32 %s9, 2
    %s16 = sadd.s32 %s9, 1
    %s17 = ssub.s32 %s9, %s16
    %p18 = scmp.eq.s32.totalorder %s17, 0
    %s20 = sadd.s32 %s19, 1
    %s21 = scalar_select %p18, %s19, %s20
    %p24 = pneg %p18
    %p25 = scmp.eq.s32.totalorder %s9, 1
    %p26 = por %p24, %p25
    %p27 = scmp.ne.s32.totalorder %s19, %s22
    %p28 = scmp.eq.s32.totalorder %s9, 0
    %p29 = por %p27, %p28
    %p30 = scmp.ne.s32.totalorder %s19, %s22
    %p31 = scmp.eq.s32.totalorder %s14, 1
    %p32 = por %p30, %p31
    %p33 = scmp.ne.s32.totalorder %s22, %s23
    %p34 = scmp.eq.s32.totalorder %s14, 0
    %p35 = por %p33, %p34
    %p36 = scmp.ne.s32.totalorder %s22, %s23
    %p37 = scmp.eq.s32.totalorder %s15, 1
    %p38 = por %p36, %p37
    %p40 = scmp.ne.s32.totalorder %s23, %s39
    %p41 = scmp.eq.s32.totalorder %s15, 0
    %p42 = por %p40, %p41
    %s44 = sadd.s32 %s43, 1
    %p47 = scmp.eq.s32.totalorder %s9, 1
    %p48 = scmp.ne.s32.totalorder %s43, %s45
    %p49 = scmp.eq.s32.totalorder %s9, 0
    %p50 = por %p48, %p49
    %p51 = scmp.ne.s32.totalorder %s43, %s45
    %p52 = scmp.eq.s32.totalorder %s14, 1
    %p53 = por %p51, %p52
    %p54 = scmp.ne.s32.totalorder %s45, %s46
    %p55 = scmp.eq.s32.totalorder %s14, 0
    %p56 = por %p54, %p55
    %p57 = scmp.ne.s32.totalorder %s45, %s46
    %p58 = scmp.eq.s32.totalorder %s15, 1
    %p59 = por %p57, %p58
    %p61 = scmp.ne.s32.totalorder %s46, %s60
    %p62 = scmp.eq.s32.totalorder %s15, 0
    %p63 = por %p61, %p62
    %s65 = sadd.s32 %s64, 1
    %p68 = scmp.eq.s32.totalorder %s9, 1
    %p69 = scmp.ne.s32.totalorder %s64, %s66
    %p70 = scmp.eq.s32.totalorder %s9, 0
    %p71 = por %p69, %p70
    %p72 = scmp.ne.s32.totalorder %s64, %s66
    %p73 = scmp.eq.s32.totalorder %s14, 1
    %p74 = por %p72, %p73
    %p75 = scmp.ne.s32.totalorder %s66, %s67
    %p76 = scmp.eq.s32.totalorder %s14, 0
    %p77 = por %p75, %p76
    %p78 = scmp.ne.s32.totalorder %s66, %s67
    %p79 = scmp.eq.s32.totalorder %s15, 1
    %p80 = por %p78, %p79
    %p82 = scmp.ne.s32.totalorder %s67, %s81
    %p83 = scmp.eq.s32.totalorder %s15, 0
    %p84 = por %p82, %p83
    %s85 = ssub.s32 %s9, %s16
    %p86 = scmp.eq.s32.totalorder %s85, 0
    %s88 = sadd.s32 %s87, 1
    %s89 = scalar_select %p86, %s87, %s88
    %p92 = pneg %p86
    %p93 = scmp.eq.s32.totalorder %s9, 1
    %p94 = por %p92, %p93
    %p95 = scmp.ne.s32.totalorder %s87, %s90
    %p96 = scmp.eq.s32.totalorder %s9, 0
    %p97 = por %p95, %p96
    %p98 = scmp.ne.s32.totalorder %s87, %s90
    %p99 = scmp.eq.s32.totalorder %s14, 1
    %p100 = por %p98, %p99
    %p101 = scmp.ne.s32.totalorder %s90, %s91
    %p102 = scmp.eq.s32.totalorder %s14, 0
    %p103 = por %p101, %p102
    %p104 = scmp.ne.s32.totalorder %s90, %s91
    %p105 = scmp.eq.s32.totalorder %s15, 1
    %p106 = por %p104, %p105
    %p108 = scmp.ne.s32.totalorder %s91, %s107
    %p109 = scmp.eq.s32.totalorder %s15, 0
    %p110 = por %p108, %p109
    %p111 = scmp.le.s32.totalorder 1, %s9
    %p112 = scmp.lt.s32.totalorder %s9, 3
    %p113 = pnand %p111, %p112
    %p114 = pneg %p113
    // Predicated region
    $region9: #{cba_forward.1} parent=5 // pred_check
      _
    $region10: #{cba_forward.1} parent=5 // pred_check_branch
      %116 = sbr.rel (%p113) target = $region12
    $region11: #{cba_forward.1} parent=5 // pred_region
      %s117 = ssub.s32 %s9, 1
      // Predicated region
      $region13: #{cba_forward.1} parent=11 // pred_check
        %p118 = pneg %p56
      $region14: #{cba_forward.1} parent=11 // pred_check_branch
        %120 = sbr.rel (%p118) target = $region16
      $region15: #{cba_forward.1} parent=11 // pred_region
        _
      $region16: #{cba_forward.1} parent=11 // pred_fallthru
        _
      // Predicated region
      $region17: #{cba_forward.1} parent=11 // pred_check
        %p121 = pneg %p77
      $region18: #{cba_forward.1} parent=11 // pred_check_branch
        %123 = sbr.rel (%p121) target = $region20
      $region19: #{cba_forward.1} parent=11 // pred_region
        _
      $region20: #{cba_forward.1} parent=11 // pred_fallthru
        _
    $region12: #{cba_forward.1} parent=5 // pred_fallthru
      _
    %p124 = scmp.lt.s32.totalorder %s9, 2
    // Predicated region
    $region21: #{cba_forward.1} parent=5 // pred_check
      %p125 = pneg %p124
    $region22: #{cba_forward.1} parent=5 // pred_check_branch
      %127 = sbr.rel (%p125) target = $region24
    $region23: #{cba_forward.1} parent=5 // pred_region
      // Predicated region
      $region25: #{cba_forward.1} parent=23 // pred_check
        %p128 = pneg %p29
      $region26: #{cba_forward.1} parent=23 // pred_check_branch
        %130 = sbr.rel (%p128) target = $region28
      $region27: #{cba_forward.1} parent=23 // pred_region
        %s131 = smul.u32 32, %s9
        %p132 = scmp.lt.s32.totalorder %s131, 63
        %s133 = scalar_select %p132, %s131, 63
        %s134 = smul.addr %s133, 4
        %s135 = scalar_lea.vmem %s0, %s134
        %s136 = smul.u32 32, %s9
      $region28: #{cba_forward.1} parent=23 // pred_fallthru
        _
    $region24: #{cba_forward.1} parent=5 // pred_fallthru
      _
    %p137 = scmp.le.s32.totalorder 1, %s9
    %p138 = scmp.lt.s32.totalorder %s9, 3
    %p139 = pnand %p137, %p138
    %p140 = pneg %p139
    // Predicated region
    $region29: #{cba_forward.1} parent=5 // pred_check
      _
    $region30: #{cba_forward.1} parent=5 // pred_check_branch
      %142 = sbr.rel (%p139) target = $region32
    $region31: #{cba_forward.1} parent=5 // pred_region
      %s143 = ssub.s32 %s9, 1
      %s144 = smul.u32 32, %s14
      %p145 = scmp.lt.s32.totalorder %s144, 63
      %s146 = scalar_select %p145, %s144, 63
      %s147 = smul.addr %s146, 4
      %s148 = scalar_lea.vmem %s0, %s147
      %p149 = pneg %p35
      %p150 = pneg %p32
      %p151 = pneg %p56
      %p152 = pneg %p53
      %p153 = pneg %p77
      %p154 = pneg %p74
      %p155 = pneg %p103
      %p156 = pneg %p100
      %s157 = smul.u32 32, %s14
      %p158 = scmp.lt.s32.totalorder %s157, 63
      %s159 = scalar_select %p158, %s157, 63
      %s160 = smul.addr %s159, 8
      %s161 = scalar_lea.vmem %s3, %s160
      %s162 = smul.u32 32, %s14
      %p163 = scmp.lt.s32.totalorder %s162, 63
      %s164 = scalar_select %p163, %s162, 63
      %s165 = smul.addr %s164, 4
      %s166 = scalar_lea.vmem %s0, %s165
      %s167 = smul.u32 32, %s14
      %s168 = smul.u32 32, %s14
      %p169 = scmp.lt.s32.totalorder %s168, 63
      %s170 = scalar_select %p169, %s168, 63
      %s171 = smul.addr %s170, 8
      %s172 = scalar_lea.vmem %s3, %s171
      %s173 = smul.u32 32, %s14
      %v175 = vld [vmem:[%s166] sm:$0xf]
      %v176 = vld [vmem:[%s166 + $0x4] sm:$0xf]
      %v177 = vld [vmem:[%s166 + $0x8] sm:$0xf]
      %v178 = vld [vmem:[%s166 + $0xc] sm:$0xf]
      %v179 = vld [vmem:[%s166 + $0x10] sm:$0xf]
      %v180 = vld [vmem:[%s166 + $0x14] sm:$0xf]
      %v181 = vld [vmem:[%s166 + $0x18] sm:$0xf]
      %v182 = vld [vmem:[%s166 + $0x1c] sm:$0xf]
      %v183 = vld [vmem:[%s166 + $0x20] sm:$0xf]
      %v184 = vld [vmem:[%s166 + $0x24] sm:$0xf]
      %v185 = vld [vmem:[%s166 + $0x28] sm:$0xf]
      %v186 = vld [vmem:[%s166 + $0x2c] sm:$0xf]
      %v187 = vld [vmem:[%s166 + $0x30] sm:$0xf]
      %v188 = vld [vmem:[%s166 + $0x34] sm:$0xf]
      %v189 = vld [vmem:[%s166 + $0x38] sm:$0xf]
      %v190 = vld [vmem:[%s166 + $0x3c] sm:$0xf]
      %v191 = vld [vmem:[%s166 + $0x40] sm:$0xf]
      %v192 = vld [vmem:[%s166 + $0x44] sm:$0xf]
      %v193 = vld [vmem:[%s166 + $0x48] sm:$0xf]
      %v194 = vld [vmem:[%s166 + $0x4c] sm:$0xf]
      %v195 = vld [vmem:[%s166 + $0x50] sm:$0xf]
      %v196 = vld [vmem:[%s166 + $0x54] sm:$0xf]
      %v197 = vld [vmem:[%s166 + $0x58] sm:$0xf]
      %v198 = vld [vmem:[%s166 + $0x5c] sm:$0xf]
      %v199 = vld [vmem:[%s166 + $0x60] sm:$0xf]
      %v200 = vld [vmem:[%s166 + $0x64] sm:$0xf]
      %v201 = vld [vmem:[%s166 + $0x68] sm:$0xf]
      %v202 = vld [vmem:[%s166 + $0x6c] sm:$0xf]
      %v203 = vld [vmem:[%s166 + $0x70] sm:$0xf]
      %v204 = vld [vmem:[%s166 + $0x74] sm:$0xf]
      %v205 = vld [vmem:[%s166 + $0x78] sm:$0xf]
      %v206 = vld [vmem:[%s166 + $0x7c] sm:$0xf]
      %v207 = vld [vmem:[%s1] sm:$0xf]
      %v208 = vld [vmem:[%s1 + $0x4] sm:$0xf]
      %v209 = vld [vmem:[%s1 + $0x8] sm:$0xf]
      %v210 = vld [vmem:[%s1 + $0xc] sm:$0xf]
      %v211 = vld [vmem:[%s1 + $0x10] sm:$0x3]
      %v212 = vld [vmem:[%s2] sm:$0x1]
      %v214 = vperm.slane %v212, 0
      %v248 = vunpack.c.l.b16 %v175
      %v249 = vunpack.c.l.b16 %v176
      %v250 = vunpack.c.l.b16 %v177
      %v251 = vunpack.c.l.b16 %v178
      %v252 = vunpack.c.l.b16 %v179
      %v253 = vunpack.c.l.b16 %v180
      %v254 = vunpack.c.l.b16 %v181
      %v255 = vunpack.c.l.b16 %v182
      %v256 = vunpack.c.l.b16 %v183
      %v257 = vunpack.c.l.b16 %v184
      %v258 = vunpack.c.l.b16 %v185
      %v259 = vunpack.c.l.b16 %v186
      %v260 = vunpack.c.l.b16 %v187
      %v261 = vunpack.c.l.b16 %v188
      %v262 = vunpack.c.l.b16 %v189
      %v263 = vunpack.c.l.b16 %v190
      %v264 = vunpack.c.l.b16 %v191
      %v265 = vunpack.c.l.b16 %v192
      %v266 = vunpack.c.l.b16 %v193
      %v267 = vunpack.c.l.b16 %v194
      %v268 = vunpack.c.l.b16 %v195
      %v269 = vunpack.c.l.b16 %v196
      %v270 = vunpack.c.l.b16 %v197
      %v271 = vunpack.c.l.b16 %v198
      %v272 = vunpack.c.l.b16 %v199
      %v273 = vunpack.c.l.b16 %v200
      %v274 = vunpack.c.l.b16 %v201
      %v275 = vunpack.c.l.b16 %v202
      %v276 = vunpack.c.l.b16 %v203
      %v277 = vunpack.c.l.b16 %v204
      %v278 = vunpack.c.l.b16 %v205
      %v279 = vunpack.c.l.b16 %v206
      %v280 = vpack.c.b16 %v249, %v248
      %v281 = vpack.c.b16 %v251, %v250
      %v282 = vpack.c.b16 %v253, %v252
      %v283 = vpack.c.b16 %v255, %v254
      %v284 = vpack.c.b16 %v257, %v256
      %v285 = vpack.c.b16 %v259, %v258
      %v286 = vpack.c.b16 %v261, %v260
      %v287 = vpack.c.b16 %v263, %v262
      %v288 = vpack.c.b16 %v265, %v264
      %v289 = vpack.c.b16 %v267, %v266
      %v290 = vpack.c.b16 %v269, %v268
      %v291 = vpack.c.b16 %v271, %v270
      %v292 = vpack.c.b16 %v273, %v272
      %v293 = vpack.c.b16 %v275, %v274
      %v294 = vpack.c.b16 %v277, %v276
      %v295 = vpack.c.b16 %v279, %v278
      %v301 = vunpack.c.l.b16 %v207
      %v302 = vunpack.c.l.b16 %v208
      %v303 = vunpack.c.l.b16 %v209
      %v304 = vunpack.c.l.b16 %v210
      %v305 = vunpack.c.l.b16 %v211
      %v306 = vpack.c.b16 %v302, %v301
      %v307 = vpack.c.b16 %v304, %v303
      %v308 = vpack.c.b16 %v305, %v305
      %vm311 = vcmask 293888
      %v313 = vsel %vm311, %v280, 0
      %v316 = vsel %vm311, %v281, 0
      %v319 = vsel %vm311, %v282, 0
      %v322 = vsel %vm311, %v283, 0
      %v325 = vsel %vm311, %v284, 0
      %v328 = vsel %vm311, %v285, 0
      %v331 = vsel %vm311, %v286, 0
      %v334 = vsel %vm311, %v287, 0
      %v337 = vsel %vm311, %v288, 0
      %v340 = vsel %vm311, %v289, 0
      %v343 = vsel %vm311, %v290, 0
      %v346 = vsel %vm311, %v291, 0
      %v349 = vsel %vm311, %v292, 0
      %v352 = vsel %vm311, %v293, 0
      %v355 = vsel %vm311, %v294, 0
      %v358 = vsel %vm311, %v295, 0
      %vm360 = vcmask 1041408
      %v362 = vsel %vm360, %v308, 0
      %364 = vmatpush.bf16.msra.mxu0 0
      %365 = vmatpush.bf16.msra.mxu0 0
      %366 = vmatpush.bf16.msra.mxu0 0
      %367 = vmatpush.bf16.msra.mxu0 0
      %368 = vmatpush.bf16.msra.mxu0 0
      %369 = vmatpush.bf16.msra.mxu0 %v362
      %370 = vmatpush.bf16.msra.mxu0 %v307
      %371 = vmatpush.bf16.msra.mxu0 %v306
      %372 = vmatmul.bf16.gmra.mxu0 %v313
      %v373 = vpop.f32.mrf.mxu0
      %v374 = vadd.f32 %v214, %v373
      %v375 = vpop.f32.mrf.mxu0
      %v376 = vadd.f32 %v214, %v375
      %377 = vmatmul.bf16.gmra.mxu0 %v316
      %v378 = vpop.f32.mrf.mxu0
      %v379 = vadd.f32 %v214, %v378
      %v380 = vpop.f32.mrf.mxu0
      %v381 = vadd.f32 %v214, %v380
      %382 = vmatmul.bf16.gmra.mxu0 %v319
      %v383 = vpop.f32.mrf.mxu0
      %v384 = vadd.f32 %v214, %v383
      %v385 = vpop.f32.mrf.mxu0
      %v386 = vadd.f32 %v214, %v385
      %387 = vmatmul.bf16.gmra.mxu0 %v322
      %v388 = vpop.f32.mrf.mxu0
      %v389 = vadd.f32 %v214, %v388
      %v390 = vpop.f32.mrf.mxu0
      %v391 = vadd.f32 %v214, %v390
      %392 = vmatmul.bf16.gmra.mxu0 %v325
      %v393 = vpop.f32.mrf.mxu0
      %v394 = vadd.f32 %v214, %v393
      %v395 = vpop.f32.mrf.mxu0
      %v396 = vadd.f32 %v214, %v395
      %397 = vmatmul.bf16.gmra.mxu0 %v328
      %v398 = vpop.f32.mrf.mxu0
      %v399 = vadd.f32 %v214, %v398
      %v400 = vpop.f32.mrf.mxu0
      %v401 = vadd.f32 %v214, %v400
      %402 = vmatmul.bf16.gmra.mxu0 %v331
      %v403 = vpop.f32.mrf.mxu0
      %v404 = vadd.f32 %v214, %v403
      %v405 = vpop.f32.mrf.mxu0
      %v406 = vadd.f32 %v214, %v405
      %407 = vmatmul.bf16.gmra.mxu0 %v334
      %v408 = vpop.f32.mrf.mxu0
      %v409 = vadd.f32 %v214, %v408
      %v410 = vpop.f32.mrf.mxu0
      %v411 = vadd.f32 %v214, %v410
      %412 = vmatmul.bf16.gmra.mxu0 %v337
      %v413 = vpop.f32.mrf.mxu0
      %v414 = vadd.f32 %v214, %v413
      %v415 = vpop.f32.mrf.mxu0
      %v416 = vadd.f32 %v214, %v415
      %417 = vmatmul.bf16.gmra.mxu0 %v340
      %v418 = vpop.f32.mrf.mxu0
      %v419 = vadd.f32 %v214, %v418
      %v420 = vpop.f32.mrf.mxu0
      %v421 = vadd.f32 %v214, %v420
      %422 = vmatmul.bf16.gmra.mxu0 %v343
      %v423 = vpop.f32.mrf.mxu0
      %v424 = vadd.f32 %v214, %v423
      %v425 = vpop.f32.mrf.mxu0
      %v426 = vadd.f32 %v214, %v425
      %427 = vmatmul.bf16.gmra.mxu0 %v346
      %v428 = vpop.f32.mrf.mxu0
      %v429 = vadd.f32 %v214, %v428
      %v430 = vpop.f32.mrf.mxu0
      %v431 = vadd.f32 %v214, %v430
      %432 = vmatmul.bf16.gmra.mxu0 %v349
      %v433 = vpop.f32.mrf.mxu0
      %v434 = vadd.f32 %v214, %v433
      %v435 = vpop.f32.mrf.mxu0
      %v436 = vadd.f32 %v214, %v435
      %437 = vmatmul.bf16.gmra.mxu0 %v352
      %v438 = vpop.f32.mrf.mxu0
      %v439 = vadd.f32 %v214, %v438
      %v440 = vpop.f32.mrf.mxu0
      %v441 = vadd.f32 %v214, %v440
      %442 = vmatmul.bf16.gmra.mxu0 %v355
      %v443 = vpop.f32.mrf.mxu0
      %v444 = vadd.f32 %v214, %v443
      %v445 = vpop.f32.mrf.mxu0
      %v446 = vadd.f32 %v214, %v445
      %447 = vmatmul.bf16.gmra.mxu0 %v358
      %v448 = vpop.f32.mrf.mxu0
      %v449 = vadd.f32 %v214, %v448
      %v450 = vpop.f32.mrf.mxu0
      %v451 = vadd.f32 %v214, %v450
      %452 = vdwg.mxu0
      %v453 = vmax.f32 %v374, 0.0
      %v454 = vmax.f32 %v376, 0.0
      %v455 = vmax.f32 %v379, 0.0
      %v456 = vmax.f32 %v381, 0.0
      %v457 = vmax.f32 %v384, 0.0
      %v458 = vmax.f32 %v386, 0.0
      %v459 = vmax.f32 %v389, 0.0
      %v460 = vmax.f32 %v391, 0.0
      %v461 = vmax.f32 %v394, 0.0
      %v462 = vmax.f32 %v396, 0.0
      %v463 = vmax.f32 %v399, 0.0
      %v464 = vmax.f32 %v401, 0.0
      %v465 = vmax.f32 %v404, 0.0
      %v466 = vmax.f32 %v406, 0.0
      %v467 = vmax.f32 %v409, 0.0
      %v468 = vmax.f32 %v411, 0.0
      %v469 = vmax.f32 %v414, 0.0
      %v470 = vmax.f32 %v416, 0.0
      %v471 = vmax.f32 %v419, 0.0
      %v472 = vmax.f32 %v421, 0.0
      %v473 = vmax.f32 %v424, 0.0
      %v474 = vmax.f32 %v426, 0.0
      %v475 = vmax.f32 %v429, 0.0
      %v476 = vmax.f32 %v431, 0.0
      %v477 = vmax.f32 %v434, 0.0
      %v478 = vmax.f32 %v436, 0.0
      %v479 = vmax.f32 %v439, 0.0
      %v480 = vmax.f32 %v441, 0.0
      %v481 = vmax.f32 %v444, 0.0
      %v482 = vmax.f32 %v446, 0.0
      %v483 = vmax.f32 %v449, 0.0
      %v484 = vmax.f32 %v451, 0.0
      %485 = vst [vmem:[%s172] sm:$0xff] %v453
      %486 = vst [vmem:[%s172 + $0x8] sm:$0xff] %v454
      %487 = vst [vmem:[%s172 + $0x10] sm:$0xff] %v455
      %488 = vst [vmem:[%s172 + $0x18] sm:$0xff] %v456
      %489 = vst [vmem:[%s172 + $0x20] sm:$0xff] %v457
      %490 = vst [vmem:[%s172 + $0x28] sm:$0xff] %v458
      %491 = vst [vmem:[%s172 + $0x30] sm:$0xff] %v459
      %492 = vst [vmem:[%s172 + $0x38] sm:$0xff] %v460
      %493 = vst [vmem:[%s172 + $0x40] sm:$0xff] %v461
      %494 = vst [vmem:[%s172 + $0x48] sm:$0xff] %v462
      %495 = vst [vmem:[%s172 + $0x50] sm:$0xff] %v463
      %496 = vst [vmem:[%s172 + $0x58] sm:$0xff] %v464
      %497 = vst [vmem:[%s172 + $0x60] sm:$0xff] %v465
      %498 = vst [vmem:[%s172 + $0x68] sm:$0xff] %v466
      %499 = vst [vmem:[%s172 + $0x70] sm:$0xff] %v467
      %500 = vst [vmem:[%s172 + $0x78] sm:$0xff] %v468
      %501 = vst [vmem:[%s172 + $0x80] sm:$0xff] %v469
      %502 = vst [vmem:[%s172 + $0x88] sm:$0xff] %v470
      %503 = vst [vmem:[%s172 + $0x90] sm:$0xff] %v471
      %504 = vst [vmem:[%s172 + $0x98] sm:$0xff] %v472
      %505 = vst [vmem:[%s172 + $0xa0] sm:$0xff] %v473
      %506 = vst [vmem:[%s172 + $0xa8] sm:$0xff] %v474
      %507 = vst [vmem:[%s172 + $0xb0] sm:$0xff] %v475
      %508 = vst [vmem:[%s172 + $0xb8] sm:$0xff] %v476
      %509 = vst [vmem:[%s172 + $0xc0] sm:$0xff] %v477
      %510 = vst [vmem:[%s172 + $0xc8] sm:$0xff] %v478
      %511 = vst [vmem:[%s172 + $0xd0] sm:$0xff] %v479
      %512 = vst [vmem:[%s172 + $0xd8] sm:$0xff] %v480
      %513 = vst [vmem:[%s172 + $0xe0] sm:$0xff] %v481
      %514 = vst [vmem:[%s172 + $0xe8] sm:$0xff] %v482
      %515 = vst [vmem:[%s172 + $0xf0] sm:$0xff] %v483
      %516 = vst [vmem:[%s172 + $0xf8] sm:$0xff] %v484
      %s517 = smul.u32 32, %s14
      %p518 = scmp.lt.s32.totalorder %s517, 63
      %s519 = scalar_select %p518, %s517, 63
      %s520 = smul.addr %s519, 8
      %s521 = scalar_lea.vmem %s3, %s520
      // Predicated region
      $region33: #{cba_forward.1} parent=31 // pred_check
        %p522 = pneg %p100
      $region34: #{cba_forward.1} parent=31 // pred_check_branch
        %524 = sbr.rel (%p522) target = $region36
      $region35: #{cba_forward.1} parent=31 // pred_region
        %s525 = smul.u32 32, %s14
      $region36: #{cba_forward.1} parent=31 // pred_fallthru
        _
    $region32: #{cba_forward.1} parent=5 // pred_fallthru
      _
    %p526 = scmp.le.s32.totalorder 2, %s9
    // Predicated region
    $region37: #{cba_forward.1} parent=5 // pred_check
      %p527 = pneg %p526
    $region38: #{cba_forward.1} parent=5 // pred_check_branch
      %529 = sbr.rel (%p527) target = $region40
    $region39: #{cba_forward.1} parent=5 // pred_region
      %s530 = ssub.s32 %s9, 2
      // Predicated region
      $region41: #{cba_forward.1} parent=39 // pred_check
        %p531 = pneg %p106
      $region42: #{cba_forward.1} parent=39 // pred_check_branch
        %533 = sbr.rel (%p531) target = $region44
      $region43: #{cba_forward.1} parent=39 // pred_region
        %s534 = smul.u32 32, %s15
        %p535 = scmp.lt.s32.totalorder %s534, 63
        %s536 = scalar_select %p535, %s534, 63
        %s537 = smul.addr %s536, 8
        %s538 = scalar_lea.vmem %s3, %s537
      $region44: #{cba_forward.1} parent=39 // pred_fallthru
        _
    $region40: #{cba_forward.1} parent=5 // pred_fallthru
      _
  $region6: #{cba_forward.1} parent=0 // loop_footer
    %s13 = sadd.s32 1, %s9
  $region7: #{cba_forward.1} parent=0 // loop_footer_branch
    %8 = sbr.rel target = $region3
  $region8: #{cba_forward.1} parent=0 // loop_exit
    _

</llo_original>
